<compile_context>
chip_gen: v5e
topology: v5e:2x2
jax: 0.10.0
libtpu: 0.0.40
codegen_flags: <defaults>
</compile_context>

<pallas_src>
import math

import numpy as np
import jax
import jax.numpy as jnp
from jax import lax
from jax.experimental import pallas as pl
from jax.experimental.pallas import tpu as pltpu


# ----------------------------- kernel -----------------------------

def _conv_bn_relu(pad_ref, w_ref, b_ref):
    """3x3 'same' conv as 3 ky-split banded matmuls + folded-BN bias + ReLU.

    pad_ref: (Bn, H2+2, W2*Cin)  activations, zero rows top/bottom, (W, C) folded into lanes
    w_ref  : (3, W2*Cin, W2*Cout) banded weights (kx taps, W padding and BN scale folded in)
    b_ref  : (1, W2*Cout)         folded bias, tiled across W2
    returns: (Bn*H2, W2*Cout)
    """
    Bn, Hp, K = pad_ref.shape
    H2 = Hp - 2
    M = Bn * H2
    acc = jnp.dot(pad_ref[:, 0:H2, :].reshape(M, K), w_ref[0],
                  preferred_element_type=jnp.float32)
    acc = acc + jnp.dot(pad_ref[:, 1:H2 + 1, :].reshape(M, K), w_ref[1],
                        preferred_element_type=jnp.float32)
    acc = acc + jnp.dot(pad_ref[:, 2:H2 + 2, :].reshape(M, K), w_ref[2],
                        preferred_element_type=jnp.float32)
    return jnp.maximum(acc + b_ref[...], 0.0)                  # folded BN bias + ReLU


def _down_conv_kernel(x_ref, inv_ref, w1, b1, w2, b2, w3, b3, out_ref, pad1, pad2):
    Bn, Hp1, L1 = pad1.shape
    H2 = Hp1 - 2
    L2 = pad2.shape[-1]

    # ---- AvgPool2d(2,2,padding=0,ceil_mode=True): 3 VPU adds + per-position divisor ----
    pooled = (x_ref[0] + x_ref[1] + x_ref[2] + x_ref[3]) * inv_ref[...]   # (Bn, H2, L1)

    # Zero only the two H border rows (W padding is folded into the banded weights).
    # Interiors are fully overwritten every layer.
    z1 = jnp.zeros((Bn, 1, L1), jnp.float32)
    z2 = jnp.zeros((Bn, 1, L2), jnp.float32)
    pad1[:, 0:1, :] = z1
    pad1[:, H2 + 1:H2 + 2, :] = z1
    pad2[:, 0:1, :] = z2
    pad2[:, H2 + 1:H2 + 2, :] = z2

    # NOTE: interior writes start at sublane offset 1 (masked stores); modest cost at these sizes.
    pad1[:, 1:H2 + 1, :] = pooled
    y = _conv_bn_relu(pad1, w1, b1)                                       # (Bn*H2, L2)
    pad2[:, 1:H2 + 1, :] = y.reshape(Bn, H2, L2)
    y = _conv_bn_relu(pad2, w2, b2)
    pad2[:, 1:H2 + 1, :] = y.reshape(Bn, H2, L2)
    y = _conv_bn_relu(pad2, w3, b3)
    out_ref[...] = y                                                      # lane-dense flat slab


# ----------------------------- host-side helpers -----------------------------

def _rup(v, m):
    return (v + m - 1) // m * m


def _tile_bytes(shape, itemsize=4):
    """VMEM footprint of an f32 array with the last two dims padded to (8, 128)."""
    s = list(shape)
    s[-1] = _rup(s[-1], 128)
    if len(s) >= 2:
        s[-2] = _rup(s[-2], 8)
    n = 1
    for d in s:
        n *= d
    return n * itemsize


def _vmem_estimate(bn, H2, L1, L2):
    in_blk = _tile_bytes((4 * bn, H2, L1))
    out_blk = _tile_bytes((bn * H2, L2))
    pads = _tile_bytes((bn, H2 + 2, L1)) + _tile_bytes((bn, H2 + 2, L2))
    wts = _tile_bytes((3, L1, L2)) + 2 * _tile_bytes((3, L2, L2))
    small = 3 * _tile_bytes((1, L2)) + _tile_bytes((H2, L1))
    # double-buffered inputs/outputs/operands + resident scratches
    return 2 * (in_blk + out_blk + wts + small) + pads


def _pick_batch_block(N, H2, L1, L2, target_rows=512, vmem_budget=24 << 20):
    """Batch block: ~target_rows matmul rows, >=2 grid steps when N>=2, VMEM-bounded."""
    bn = max(1, min(N, -(-target_rows // max(H2, 1))))
    if N >= 2:                              # keep >=2 grid steps so both v7x TensorCores get work
        bn = min(bn, (N + 1) // 2)
    while bn > 1 and _vmem_estimate(bn, H2, L1, L2) > vmem_budget:
        bn -= 1
    if bn < N:                              # multi-block grid: bn*H2 must be sublane aligned
        step = 8 // math.gcd(H2, 8)
        bn = -(-bn // step) * step          # round up; batch gets zero-padded if needed
        if bn >= N:
            bn = N                          # degenerates to a single full-extent block
    return bn


def _make_band(w_hwio, scale, W2):
    """(3,3,ci,co) conv weights -> (3, W2*ci, W2*co) banded matrices.

    Folds the BN scale into the weights and absorbs the W-dimension zero padding and the kx taps
    into the band structure, so the kernel only has to handle the ky shifts."""
    w = np.asarray(w_hwio, np.float32) * np.asarray(scale, np.float32)[None, None, None, :]
    _, _, ci, co = w.shape
    band = np.zeros((3, W2 * ci, W2 * co), np.float32)
    for x in range(W2):
        for kx in range(3):
            j = x + kx - 1
            if 0 <= j < W2:
                band[:, j * ci:(j + 1) * ci, x * co:(x + 1) * co] = w[:, kx]
    return jnp.asarray(band)


def _make_inv(H, W, H2, W2, cin):
    """Reciprocal window-element counts for AvgPool2d(2,2,ceil_mode=True) -> (H2, W2*cin)."""
    hcnt = np.minimum(2 * np.arange(H2) + 2, H) - 2 * np.arange(H2)
    wcnt = np.minimum(2 * np.arange(W2) + 2, W) - 2 * np.arange(W2)
    inv = (1.0 / (hcnt[:, None] * wcnt[None, :])).astype(np.float32)
    return jnp.asarray(np.repeat(inv, cin, axis=1))


# ----------------------------- wrapper -----------------------------

def down_conv_block(x_nchw, params, eps=1e-3):
    x = x_nchw.astype(jnp.float32)
    N, Cin, H, W = x.shape
    Cout = params["w1"].shape[-1]
    H2, W2 = -(-H // 2), -(-W // 2)
    Hp, Wp = 2 * H2, 2 * W2
    if (Hp, Wp) != (H, W):                                     # ceil_mode: zero-pad spatially;
        x = jnp.pad(x, ((0, 0), (0, 0), (0, Hp - H), (0, Wp - W)))  # inv map fixes the divisors
    L1, L2 = W2 * Cin, W2 * Cout

    # Single relayout straight from NCHW: the four 2x2-pool quadrants become a leading axis and
    # (W, C) fold into a lane-dense last axis.  (A model kept in this layout skips this transpose.)
    x = x.reshape(N, Cin, H2, 2, W2, 2)
    x = jnp.transpose(x, (3, 5, 0, 2, 4, 1)).reshape(4, N, H2, L1)

    inv = _make_inv(H, W, H2, W2, Cin)

    def fold(i):
        gamma = np.asarray(params[f"gamma{i}"], np.float32)
        var = np.asarray(params[f"var{i}"], np.float32)
        bconv = np.asarray(params[f"b{i}"], np.float32)
        mean = np.asarray(params[f"mean{i}"], np.float32)
        beta = np.asarray(params[f"beta{i}"], np.float32)
        scale = gamma / np.sqrt(var + eps)
        bias = (bconv - mean) * scale + beta
        band = _make_band(np.asarray(params[f"w{i}"], np.float32), scale, W2)
        return band, jnp.asarray(np.tile(bias, W2)[None, :])   # bias tiled across W2 lanes

    w1, b1 = fold(1)
    w2, b2 = fold(2)
    w3, b3 = fold(3)

    bn = _pick_batch_block(N, H2, L1, L2)
    n_pad = -(-N // bn) * bn
    if n_pad != N:                                             # ragged batch -> zero-pad (discarded)
        x = jnp.pad(x, ((0, 0), (0, n_pad - N), (0, 0), (0, 0)))
    grid = (n_pad // bn,)

    vmem_limit = int(min(64 << 20, max(_vmem_estimate(bn, H2, L1, L2) + (4 << 20), 16 << 20)))

    const3 = lambda n: (0, 0, 0)
    const2 = lambda n: (0, 0)

    out = pl.pallas_call(
        _down_conv_kernel,
        out_shape=jax.ShapeDtypeStruct((n_pad * H2, L2), jnp.float32),
        grid=grid,
        in_specs=[
            pl.BlockSpec((4, bn, H2, L1), lambda n: (0, n, 0, 0)),   # pool quadrants, lane-dense
            pl.BlockSpec((H2, L1), const2),                          # ceil_mode divisors
            pl.BlockSpec((3, L1, L2), const3),                       # banded weights, layer 1
            pl.BlockSpec((1, L2), const2),                           # folded bias, layer 1
            pl.BlockSpec((3, L2, L2), const3),
            pl.BlockSpec((1, L2), const2),
            pl.BlockSpec((3, L2, L2), const3),
            pl.BlockSpec((1, L2), const2),
        ],
        out_specs=pl.BlockSpec((bn * H2, L2), lambda n: (n, 0)),     # lane-dense flat output slab
        scratch_shapes=[
            pltpu.VMEM((bn, H2 + 2, L1), jnp.float32),               # H-padded layer-1 input
            pltpu.VMEM((bn, H2 + 2, L2), jnp.float32),               # H-padded layers-2/3 input
        ],
        compiler_params=pltpu.CompilerParams(
            dimension_semantics=("parallel",),
            vmem_limit_bytes=vmem_limit,
        ),
    )(x, inv, w1, b1, w2, b2, w3, b3)

    out = out.reshape(n_pad, H2, W2, Cout)[:N]
    return jnp.transpose(out, (0, 3, 1, 2))                          # back to NCHW


# ----------------------------- reference & test -----------------------------

def reference(x_nchw, params, eps=1e-3):
    """Pure-JAX reference of the PyTorch forward (inference-mode BN, even spatial sizes)."""
    x = jnp.transpose(x_nchw, (0, 2, 3, 1)).astype(jnp.float32)
    N, H, W, C = x.shape
    x = x.reshape(N, H // 2, 2, W // 2, 2, C).mean(axis=(2, 4))
    for i in (1, 2, 3):
        x = lax.conv_general_dilated(
            x, params[f"w{i}"], (1, 1), "SAME",
            dimension_numbers=("NHWC", "HWIO", "NHWC")) + params[f"b{i}"]
        x = (x - params[f"mean{i}"]) / jnp.sqrt(params[f"var{i}"] + eps)
        x = x * params[f"gamma{i}"] + params[f"beta{i}"]
        x = jnp.maximum(x, 0.0)
    return jnp.transpose(x, (0, 3, 1, 2))


def init_params(key, cin, cout):
    params = {}
    dims = [(cin, cout), (cout, cout), (cout, cout)]
    for i, (ci, co) in enumerate(dims, start=1):
        key, k0, k1, k2, k3, k4, k5 = jax.random.split(key, 7)
        params[f"w{i}"] = jax.random.normal(k0, (3, 3, ci, co), jnp.float32) / np.sqrt(9 * ci)
        params[f"b{i}"] = 0.1 * jax.random.normal(k1, (co,), jnp.float32)
        params[f"gamma{i}"] = 1.0 + 0.1 * jax.random.normal(k2, (co,), jnp.float32)
        params[f"beta{i}"] = 0.1 * jax.random.normal(k3, (co,), jnp.float32)
        params[f"mean{i}"] = 0.1 * jax.random.normal(k4, (co,), jnp.float32)
        params[f"var{i}"] = jax.random.uniform(k5, (co,), jnp.float32, 0.5, 1.5)
    return params


if __name__ == "__main__":
    key = jax.random.PRNGKey(0)
    kx, kp = jax.random.split(key)
    input_dim, output_dim = 4, 8
    x = jax.random.normal(kx, (2, input_dim, 16, 16), jnp.float32)   # NCHW
    params = init_params(kp, input_dim, output_dim)

    out = jax.block_until_ready(down_conv_block(x, params))
    ref = reference(x, params)

    assert out.shape == (2, output_dim, 8, 8), out.shape
    err = float(jnp.max(jnp.abs(out - ref)))
    assert err < 1e-3, f"max abs error too large: {err}"
    print("KERNEL_OK")
</pallas_src>

<mosaic_0001>
module attributes {stable_mosaic.version = 11 : i64} {
  func.func @_down_conv_kernel(%arg0: i32, %arg1: memref<4x1x8x32xf32, #tpu.memory_space<vmem>>, %arg2: memref<8x32xf32, #tpu.memory_space<vmem>>, %arg3: memref<3x32x64xf32, #tpu.memory_space<vmem>>, %arg4: memref<1x64xf32, #tpu.memory_space<vmem>>, %arg5: memref<3x64x64xf32, #tpu.memory_space<vmem>>, %arg6: memref<1x64xf32, #tpu.memory_space<vmem>>, %arg7: memref<3x64x64xf32, #tpu.memory_space<vmem>>, %arg8: memref<1x64xf32, #tpu.memory_space<vmem>>, %arg9: memref<8x64xf32, #tpu.memory_space<vmem>>, %arg10: memref<1x10x32xf32, #tpu.memory_space<vmem>>, %arg11: memref<1x10x64xf32, #tpu.memory_space<vmem>>) attributes {dimension_semantics = [#tpu.dimension_semantics<parallel>], iteration_bounds = array<i64: 2>, scalar_prefetch = 0 : i64, scratch_operands = 2 : i64, tpu.core_type = #tpu.core_type<tc>, window_params = [{transform_indices = @transform_0, window_bounds = array<i64: 4, 1, 8, 32>}, {pipeline_mode = #tpu.pipeline_mode<synchronous>, transform_indices = @transform_1, window_bounds = array<i64: 8, 32>}, {pipeline_mode = #tpu.pipeline_mode<synchronous>, transform_indices = @transform_2, window_bounds = array<i64: 3, 32, 64>}, {pipeline_mode = #tpu.pipeline_mode<synchronous>, transform_indices = @transform_3, window_bounds = array<i64: 1, 64>}, {pipeline_mode = #tpu.pipeline_mode<synchronous>, transform_indices = @transform_4, window_bounds = array<i64: 3, 64, 64>}, {pipeline_mode = #tpu.pipeline_mode<synchronous>, transform_indices = @transform_5, window_bounds = array<i64: 1, 64>}, {pipeline_mode = #tpu.pipeline_mode<synchronous>, transform_indices = @transform_6, window_bounds = array<i64: 3, 64, 64>}, {pipeline_mode = #tpu.pipeline_mode<synchronous>, transform_indices = @transform_7, window_bounds = array<i64: 1, 64>}, {transform_indices = @transform_8, window_bounds = array<i64: 8, 64>}]} {
    %c0 = arith.constant 0 : index
    %c0_0 = arith.constant 0 : index
    %c0_1 = arith.constant 0 : index
    %c0_2 = arith.constant 0 : index
    %0 = vector.load %arg1[%c0, %c0_0, %c0_1, %c0_2] : memref<4x1x8x32xf32, #tpu.memory_space<vmem>>, vector<1x1x8x32xf32>
    %1 = vector.shape_cast %0 : vector<1x1x8x32xf32> to vector<1x8x32xf32>
    %c1 = arith.constant 1 : index
    %c0_3 = arith.constant 0 : index
    %c0_4 = arith.constant 0 : index
    %c0_5 = arith.constant 0 : index
    %2 = vector.load %arg1[%c1, %c0_3, %c0_4, %c0_5] : memref<4x1x8x32xf32, #tpu.memory_space<vmem>>, vector<1x1x8x32xf32>
    %3 = vector.shape_cast %2 : vector<1x1x8x32xf32> to vector<1x8x32xf32>
    %4 = arith.addf %1, %3 : vector<1x8x32xf32>
    %c2 = arith.constant 2 : index
    %c0_6 = arith.constant 0 : index
    %c0_7 = arith.constant 0 : index
    %c0_8 = arith.constant 0 : index
    %5 = vector.load %arg1[%c2, %c0_6, %c0_7, %c0_8] : memref<4x1x8x32xf32, #tpu.memory_space<vmem>>, vector<1x1x8x32xf32>
    %6 = vector.shape_cast %5 : vector<1x1x8x32xf32> to vector<1x8x32xf32>
    %7 = arith.addf %4, %6 : vector<1x8x32xf32>
    %c3 = arith.constant 3 : index
    %c0_9 = arith.constant 0 : index
    %c0_10 = arith.constant 0 : index
    %c0_11 = arith.constant 0 : index
    %8 = vector.load %arg1[%c3, %c0_9, %c0_10, %c0_11] : memref<4x1x8x32xf32, #tpu.memory_space<vmem>>, vector<1x1x8x32xf32>
    %9 = vector.shape_cast %8 : vector<1x1x8x32xf32> to vector<1x8x32xf32>
    %10 = arith.addf %7, %9 : vector<1x8x32xf32>
    %c0_12 = arith.constant 0 : index
    %c0_13 = arith.constant 0 : index
    %11 = vector.load %arg2[%c0_12, %c0_13] : memref<8x32xf32, #tpu.memory_space<vmem>>, vector<8x32xf32>
    %12 = vector.shape_cast %11 : vector<8x32xf32> to vector<1x8x32xf32>
    %13 = arith.mulf %10, %12 : vector<1x8x32xf32>
    %cst = arith.constant 0.000000e+00 : f32
    %14 = vector.broadcast %cst : f32 to vector<1x1x32xf32>
    %cst_14 = arith.constant 0.000000e+00 : f32
    %15 = vector.broadcast %cst_14 : f32 to vector<1x1x64xf32>
    %c0_15 = arith.constant 0 : index
    %c0_16 = arith.constant 0 : index
    %c0_17 = arith.constant 0 : index
    %16 = vector.load %arg10[%c0_15, %c0_16, %c0_17] : memref<1x10x32xf32, #tpu.memory_space<vmem>>, vector<1x1x32xf32>
    tpu.vector_store %arg10[%c0_15, %c0_16, %c0_17], %14 {strides = array<i32>} : memref<1x10x32xf32, #tpu.memory_space<vmem>>, vector<1x1x32xf32>,
    %c0_18 = arith.constant 0 : index
    %c9 = arith.constant 9 : index
    %c0_19 = arith.constant 0 : index
    %17 = vector.load %arg10[%c0_18, %c9, %c0_19] : memref<1x10x32xf32, #tpu.memory_space<vmem>>, vector<1x1x32xf32>
    tpu.vector_store %arg10[%c0_18, %c9, %c0_19], %14 {strides = array<i32>} : memref<1x10x32xf32, #tpu.memory_space<vmem>>, vector<1x1x32xf32>,
    %c0_20 = arith.constant 0 : index
    %c0_21 = arith.constant 0 : index
    %c0_22 = arith.constant 0 : index
    %18 = vector.load %arg11[%c0_20, %c0_21, %c0_22] : memref<1x10x64xf32, #tpu.memory_space<vmem>>, vector<1x1x64xf32>
    tpu.vector_store %arg11[%c0_20, %c0_21, %c0_22], %15 {strides = array<i32>} : memref<1x10x64xf32, #tpu.memory_space<vmem>>, vector<1x1x64xf32>,
    %c0_23 = arith.constant 0 : index
    %c9_24 = arith.constant 9 : index
    %c0_25 = arith.constant 0 : index
    %19 = vector.load %arg11[%c0_23, %c9_24, %c0_25] : memref<1x10x64xf32, #tpu.memory_space<vmem>>, vector<1x1x64xf32>
    tpu.vector_store %arg11[%c0_23, %c9_24, %c0_25], %15 {strides = array<i32>} : memref<1x10x64xf32, #tpu.memory_space<vmem>>, vector<1x1x64xf32>,
    %c0_26 = arith.constant 0 : index
    %c1_27 = arith.constant 1 : index
    %c0_28 = arith.constant 0 : index
    %20 = vector.load %arg10[%c0_26, %c1_27, %c0_28] : memref<1x10x32xf32, #tpu.memory_space<vmem>>, vector<1x8x32xf32>
    tpu.vector_store %arg10[%c0_26, %c1_27, %c0_28], %13 {strides = array<i32>} : memref<1x10x32xf32, #tpu.memory_space<vmem>>, vector<1x8x32xf32>,
    %c0_29 = arith.constant 0 : index
    %c0_30 = arith.constant 0 : index
    %c0_31 = arith.constant 0 : index
    %21 = vector.load %arg10[%c0_29, %c0_30, %c0_31] : memref<1x10x32xf32, #tpu.memory_space<vmem>>, vector<1x8x32xf32>
    %22 = vector.shape_cast %21 : vector<1x8x32xf32> to vector<8x32xf32>
    %c0_32 = arith.constant 0 : index
    %c0_33 = arith.constant 0 : index
    %c0_34 = arith.constant 0 : index
    %23 = vector.load %arg3[%c0_32, %c0_33, %c0_34] : memref<3x32x64xf32, #tpu.memory_space<vmem>>, vector<1x32x64xf32>
    %24 = vector.shape_cast %23 : vector<1x32x64xf32> to vector<32x64xf32>
    %cst_35 = arith.constant dense<0.000000e+00> : vector<8x64xf32>
    %25 = tpu.matmul %22, %24, %cst_35 {dimension_numbers = #tpu.dot_dimension_numbers<[1], [0], [0], [1], [0, 0, 1, 1], [], []>} : vector<8x32xf32>, vector<32x64xf32>, vector<8x64xf32> -> vector<8x64xf32>
    %c0_36 = arith.constant 0 : index
    %c1_37 = arith.constant 1 : index
    %c0_38 = arith.constant 0 : index
    %26 = vector.load %arg10[%c0_36, %c1_37, %c0_38] : memref<1x10x32xf32, #tpu.memory_space<vmem>>, vector<1x8x32xf32>
    %27 = vector.shape_cast %26 : vector<1x8x32xf32> to vector<8x32xf32>
    %c1_39 = arith.constant 1 : index
    %c0_40 = arith.constant 0 : index
    %c0_41 = arith.constant 0 : index
    %28 = vector.load %arg3[%c1_39, %c0_40, %c0_41] : memref<3x32x64xf32, #tpu.memory_space<vmem>>, vector<1x32x64xf32>
    %29 = vector.shape_cast %28 : vector<1x32x64xf32> to vector<32x64xf32>
    %cst_42 = arith.constant dense<0.000000e+00> : vector<8x64xf32>
    %30 = tpu.matmul %27, %29, %cst_42 {dimension_numbers = #tpu.dot_dimension_numbers<[1], [0], [0], [1], [0, 0, 1, 1], [], []>} : vector<8x32xf32>, vector<32x64xf32>, vector<8x64xf32> -> vector<8x64xf32>
    %31 = arith.addf %25, %30 : vector<8x64xf32>
    %c0_43 = arith.constant 0 : index
    %c2_44 = arith.constant 2 : index
    %c0_45 = arith.constant 0 : index
    %32 = vector.load %arg10[%c0_43, %c2_44, %c0_45] : memref<1x10x32xf32, #tpu.memory_space<vmem>>, vector<1x8x32xf32>
    %33 = vector.shape_cast %32 : vector<1x8x32xf32> to vector<8x32xf32>
    %c2_46 = arith.constant 2 : index
    %c0_47 = arith.constant 0 : index
    %c0_48 = arith.constant 0 : index
    %34 = vector.load %arg3[%c2_46, %c0_47, %c0_48] : memref<3x32x64xf32, #tpu.memory_space<vmem>>, vector<1x32x64xf32>
    %35 = vector.shape_cast %34 : vector<1x32x64xf32> to vector<32x64xf32>
    %cst_49 = arith.constant dense<0.000000e+00> : vector<8x64xf32>
    %36 = tpu.matmul %33, %35, %cst_49 {dimension_numbers = #tpu.dot_dimension_numbers<[1], [0], [0], [1], [0, 0, 1, 1], [], []>} : vector<8x32xf32>, vector<32x64xf32>, vector<8x64xf32> -> vector<8x64xf32>
    %37 = arith.addf %31, %36 : vector<8x64xf32>
    %c0_50 = arith.constant 0 : index
    %c0_51 = arith.constant 0 : index
    %38 = vector.load %arg4[%c0_50, %c0_51] : memref<1x64xf32, #tpu.memory_space<vmem>>, vector<1x64xf32>
    %39 = vector.broadcast %38 : vector<1x64xf32> to vector<8x64xf32>
    %40 = arith.addf %37, %39 : vector<8x64xf32>
    %cst_52 = arith.constant 0.000000e+00 : f32
    %41 = vector.broadcast %cst_52 : f32 to vector<8x64xf32>
    %42 = arith.maximumf %40, %41 : vector<8x64xf32>
    %43 = vector.shape_cast %42 : vector<8x64xf32> to vector<1x8x64xf32>
    %c0_53 = arith.constant 0 : index
    %c1_54 = arith.constant 1 : index
    %c0_55 = arith.constant 0 : index
    %44 = vector.load %arg11[%c0_53, %c1_54, %c0_55] : memref<1x10x64xf32, #tpu.memory_space<vmem>>, vector<1x8x64xf32>
    tpu.vector_store %arg11[%c0_53, %c1_54, %c0_55], %43 {strides = array<i32>} : memref<1x10x64xf32, #tpu.memory_space<vmem>>, vector<1x8x64xf32>,
    %c0_56 = arith.constant 0 : index
    %c0_57 = arith.constant 0 : index
    %c0_58 = arith.constant 0 : index
    %45 = vector.load %arg11[%c0_56, %c0_57, %c0_58] : memref<1x10x64xf32, #tpu.memory_space<vmem>>, vector<1x8x64xf32>
    %46 = vector.shape_cast %45 : vector<1x8x64xf32> to vector<8x64xf32>
    %c0_59 = arith.constant 0 : index
    %c0_60 = arith.constant 0 : index
    %c0_61 = arith.constant 0 : index
    %47 = vector.load %arg5[%c0_59, %c0_60, %c0_61] : memref<3x64x64xf32, #tpu.memory_space<vmem>>, vector<1x64x64xf32>
    %48 = vector.shape_cast %47 : vector<1x64x64xf32> to vector<64x64xf32>
    %cst_62 = arith.constant dense<0.000000e+00> : vector<8x64xf32>
    %49 = tpu.matmul %46, %48, %cst_62 {dimension_numbers = #tpu.dot_dimension_numbers<[1], [0], [0], [1], [0, 0, 1, 1], [], []>} : vector<8x64xf32>, vector<64x64xf32>, vector<8x64xf32> -> vector<8x64xf32>
    %c0_63 = arith.constant 0 : index
    %c1_64 = arith.constant 1 : index
    %c0_65 = arith.constant 0 : index
    %50 = vector.load %arg11[%c0_63, %c1_64, %c0_65] : memref<1x10x64xf32, #tpu.memory_space<vmem>>, vector<1x8x64xf32>
    %51 = vector.shape_cast %50 : vector<1x8x64xf32> to vector<8x64xf32>
    %c1_66 = arith.constant 1 : index
    %c0_67 = arith.constant 0 : index
    %c0_68 = arith.constant 0 : index
    %52 = vector.load %arg5[%c1_66, %c0_67, %c0_68] : memref<3x64x64xf32, #tpu.memory_space<vmem>>, vector<1x64x64xf32>
    %53 = vector.shape_cast %52 : vector<1x64x64xf32> to vector<64x64xf32>
    %cst_69 = arith.constant dense<0.000000e+00> : vector<8x64xf32>
    %54 = tpu.matmul %51, %53, %cst_69 {dimension_numbers = #tpu.dot_dimension_numbers<[1], [0], [0], [1], [0, 0, 1, 1], [], []>} : vector<8x64xf32>, vector<64x64xf32>, vector<8x64xf32> -> vector<8x64xf32>
    %55 = arith.addf %49, %54 : vector<8x64xf32>
    %c0_70 = arith.constant 0 : index
    %c2_71 = arith.constant 2 : index
    %c0_72 = arith.constant 0 : index
    %56 = vector.load %arg11[%c0_70, %c2_71, %c0_72] : memref<1x10x64xf32, #tpu.memory_space<vmem>>, vector<1x8x64xf32>
    %57 = vector.shape_cast %56 : vector<1x8x64xf32> to vector<8x64xf32>
    %c2_73 = arith.constant 2 : index
    %c0_74 = arith.constant 0 : index
    %c0_75 = arith.constant 0 : index
    %58 = vector.load %arg5[%c2_73, %c0_74, %c0_75] : memref<3x64x64xf32, #tpu.memory_space<vmem>>, vector<1x64x64xf32>
    %59 = vector.shape_cast %58 : vector<1x64x64xf32> to vector<64x64xf32>
    %cst_76 = arith.constant dense<0.000000e+00> : vector<8x64xf32>
    %60 = tpu.matmul %57, %59, %cst_76 {dimension_numbers = #tpu.dot_dimension_numbers<[1], [0], [0], [1], [0, 0, 1, 1], [], []>} : vector<8x64xf32>, vector<64x64xf32>, vector<8x64xf32> -> vector<8x64xf32>
    %61 = arith.addf %55, %60 : vector<8x64xf32>
    %c0_77 = arith.constant 0 : index
    %c0_78 = arith.constant 0 : index
    %62 = vector.load %arg6[%c0_77, %c0_78] : memref<1x64xf32, #tpu.memory_space<vmem>>, vector<1x64xf32>
    %63 = vector.broadcast %62 : vector<1x64xf32> to vector<8x64xf32>
    %64 = arith.addf %61, %63 : vector<8x64xf32>
    %cst_79 = arith.constant 0.000000e+00 : f32
    %65 = vector.broadcast %cst_79 : f32 to vector<8x64xf32>
    %66 = arith.maximumf %64, %65 : vector<8x64xf32>
    %67 = vector.shape_cast %66 : vector<8x64xf32> to vector<1x8x64xf32>
    %c0_80 = arith.constant 0 : index
    %c1_81 = arith.constant 1 : index
    %c0_82 = arith.constant 0 : index
    %68 = vector.load %arg11[%c0_80, %c1_81, %c0_82] : memref<1x10x64xf32, #tpu.memory_space<vmem>>, vector<1x8x64xf32>
    tpu.vector_store %arg11[%c0_80, %c1_81, %c0_82], %67 {strides = array<i32>} : memref<1x10x64xf32, #tpu.memory_space<vmem>>, vector<1x8x64xf32>,
    %c0_83 = arith.constant 0 : index
    %c0_84 = arith.constant 0 : index
    %c0_85 = arith.constant 0 : index
    %69 = vector.load %arg11[%c0_83, %c0_84, %c0_85] : memref<1x10x64xf32, #tpu.memory_space<vmem>>, vector<1x8x64xf32>
    %70 = vector.shape_cast %69 : vector<1x8x64xf32> to vector<8x64xf32>
    %c0_86 = arith.constant 0 : index
    %c0_87 = arith.constant 0 : index
    %c0_88 = arith.constant 0 : index
    %71 = vector.load %arg7[%c0_86, %c0_87, %c0_88] : memref<3x64x64xf32, #tpu.memory_space<vmem>>, vector<1x64x64xf32>
    %72 = vector.shape_cast %71 : vector<1x64x64xf32> to vector<64x64xf32>
    %cst_89 = arith.constant dense<0.000000e+00> : vector<8x64xf32>
    %73 = tpu.matmul %70, %72, %cst_89 {dimension_numbers = #tpu.dot_dimension_numbers<[1], [0], [0], [1], [0, 0, 1, 1], [], []>} : vector<8x64xf32>, vector<64x64xf32>, vector<8x64xf32> -> vector<8x64xf32>
    %c0_90 = arith.constant 0 : index
    %c1_91 = arith.constant 1 : index
    %c0_92 = arith.constant 0 : index
    %74 = vector.load %arg11[%c0_90, %c1_91, %c0_92] : memref<1x10x64xf32, #tpu.memory_space<vmem>>, vector<1x8x64xf32>
    %75 = vector.shape_cast %74 : vector<1x8x64xf32> to vector<8x64xf32>
    %c1_93 = arith.constant 1 : index
    %c0_94 = arith.constant 0 : index
    %c0_95 = arith.constant 0 : index
    %76 = vector.load %arg7[%c1_93, %c0_94, %c0_95] : memref<3x64x64xf32, #tpu.memory_space<vmem>>, vector<1x64x64xf32>
    %77 = vector.shape_cast %76 : vector<1x64x64xf32> to vector<64x64xf32>
    %cst_96 = arith.constant dense<0.000000e+00> : vector<8x64xf32>
    %78 = tpu.matmul %75, %77, %cst_96 {dimension_numbers = #tpu.dot_dimension_numbers<[1], [0], [0], [1], [0, 0, 1, 1], [], []>} : vector<8x64xf32>, vector<64x64xf32>, vector<8x64xf32> -> vector<8x64xf32>
    %79 = arith.addf %73, %78 : vector<8x64xf32>
    %c0_97 = arith.constant 0 : index
    %c2_98 = arith.constant 2 : index
    %c0_99 = arith.constant 0 : index
    %80 = vector.load %arg11[%c0_97, %c2_98, %c0_99] : memref<1x10x64xf32, #tpu.memory_space<vmem>>, vector<1x8x64xf32>
    %81 = vector.shape_cast %80 : vector<1x8x64xf32> to vector<8x64xf32>
    %c2_100 = arith.constant 2 : index
    %c0_101 = arith.constant 0 : index
    %c0_102 = arith.constant 0 : index
    %82 = vector.load %arg7[%c2_100, %c0_101, %c0_102] : memref<3x64x64xf32, #tpu.memory_space<vmem>>, vector<1x64x64xf32>
    %83 = vector.shape_cast %82 : vector<1x64x64xf32> to vector<64x64xf32>
    %cst_103 = arith.constant dense<0.000000e+00> : vector<8x64xf32>
    %84 = tpu.matmul %81, %83, %cst_103 {dimension_numbers = #tpu.dot_dimension_numbers<[1], [0], [0], [1], [0, 0, 1, 1], [], []>} : vector<8x64xf32>, vector<64x64xf32>, vector<8x64xf32> -> vector<8x64xf32>
    %85 = arith.addf %79, %84 : vector<8x64xf32>
    %c0_104 = arith.constant 0 : index
    %c0_105 = arith.constant 0 : index
    %86 = vector.load %arg8[%c0_104, %c0_105] : memref<1x64xf32, #tpu.memory_space<vmem>>, vector<1x64xf32>
    %87 = vector.broadcast %86 : vector<1x64xf32> to vector<8x64xf32>
    %88 = arith.addf %85, %87 : vector<8x64xf32>
    %cst_106 = arith.constant 0.000000e+00 : f32
    %89 = vector.broadcast %cst_106 : f32 to vector<8x64xf32>
    %90 = arith.maximumf %88, %89 : vector<8x64xf32>
    %c0_107 = arith.constant 0 : index
    %c0_108 = arith.constant 0 : index
    %91 = vector.load %arg9[%c0_107, %c0_108] : memref<8x64xf32, #tpu.memory_space<vmem>>, vector<8x64xf32>
    tpu.vector_store %arg9[%c0_107, %c0_108], %90 {strides = array<i32>} : memref<8x64xf32, #tpu.memory_space<vmem>>, vector<8x64xf32>,
    return
  }
  func.func @transform_0(%arg0: i32) -> (i32, i32, i32, i32) {
    %c0_i32 = arith.constant 0 : i32
    %c0_i32_0 = arith.constant 0 : i32
    %c0_i32_1 = arith.constant 0 : i32
    %c0_i32_2 = arith.constant 0 : i32
    return %c0_i32, %arg0, %c0_i32_0, %c0_i32_1 : i32, i32, i32, i32
  }
  func.func @transform_1(%arg0: i32) -> (i32, i32) {
    %c0_i32 = arith.constant 0 : i32
    %c0_i32_0 = arith.constant 0 : i32
    %c0_i32_1 = arith.constant 0 : i32
    return %c0_i32, %c0_i32_0 : i32, i32
  }
  func.func @transform_2(%arg0: i32) -> (i32, i32, i32) {
    %c0_i32 = arith.constant 0 : i32
    %c0_i32_0 = arith.constant 0 : i32
    %c0_i32_1 = arith.constant 0 : i32
    %c0_i32_2 = arith.constant 0 : i32
    return %c0_i32, %c0_i32_0, %c0_i32_1 : i32, i32, i32
  }
  func.func @transform_3(%arg0: i32) -> (i32, i32) {
    %c0_i32 = arith.constant 0 : i32
    %c0_i32_0 = arith.constant 0 : i32
    %c0_i32_1 = arith.constant 0 : i32
    return %c0_i32, %c0_i32_0 : i32, i32
  }
  func.func @transform_4(%arg0: i32) -> (i32, i32, i32) {
    %c0_i32 = arith.constant 0 : i32
    %c0_i32_0 = arith.constant 0 : i32
    %c0_i32_1 = arith.constant 0 : i32
    %c0_i32_2 = arith.constant 0 : i32
    return %c0_i32, %c0_i32_0, %c0_i32_1 : i32, i32, i32
  }
  func.func @transform_5(%arg0: i32) -> (i32, i32) {
    %c0_i32 = arith.constant 0 : i32
    %c0_i32_0 = arith.constant 0 : i32
    %c0_i32_1 = arith.constant 0 : i32
    return %c0_i32, %c0_i32_0 : i32, i32
  }
  func.func @transform_6(%arg0: i32) -> (i32, i32, i32) {
    %c0_i32 = arith.constant 0 : i32
    %c0_i32_0 = arith.constant 0 : i32
    %c0_i32_1 = arith.constant 0 : i32
    %c0_i32_2 = arith.constant 0 : i32
    return %c0_i32, %c0_i32_0, %c0_i32_1 : i32, i32, i32
  }
  func.func @transform_7(%arg0: i32) -> (i32, i32) {
    %c0_i32 = arith.constant 0 : i32
    %c0_i32_0 = arith.constant 0 : i32
    %c0_i32_1 = arith.constant 0 : i32
    return %c0_i32, %c0_i32_0 : i32, i32
  }
  func.func @transform_8(%arg0: i32) -> (i32, i32) {
    %c0_i32 = arith.constant 0 : i32
    %c0_i32_0 = arith.constant 0 : i32
    return %arg0, %c0_i32 : i32, i32
  }
}

</mosaic_0001>

<llo_original>
// kernel: tpu_custom_call.1
$region0: #{tpu_custom_call.1}
  #allocation0 [shape = 'u32[]', space=smem, size = 0x4, offset = 0x4, fixed_abs, tag = 'smem constant byte address 0x4 - core index']
  #allocation1 [shape = 'u32[72,128]{1,0:T(1,128)}', space=vmem, size = 0x9000, scoped, tag = 'internal scratch']
  #allocation2 [shape = 'f32[1,10,32]{2,1,0:T(8,128)}', space=vmem, size = 0x2000, scoped, tag = 'scratch operand']
  #allocation3 [shape = 'f32[1,10,64]{2,1,0:T(8,128)}', space=vmem, size = 0x2000, scoped, tag = 'scratch operand']
  %s0 = inlined_call_operand.hbm [shape: f32[4,2,8,32], index: 0, kind: input, shape index: {}]
  %s1 = inlined_call_operand.hbm [shape: f32[8,32], index: 1, kind: input, shape index: {}]
  %s2 = inlined_call_operand.hbm [shape: f32[3,32,64], index: 2, kind: input, shape index: {}]
  %s3 = inlined_call_operand.vmem [shape: f32[1,64], index: 3, kind: input, shape index: {}]
  %s4 = inlined_call_operand.hbm [shape: f32[3,64,64], index: 4, kind: input, shape index: {}]
  %s5 = inlined_call_operand.vmem [shape: f32[1,64], index: 5, kind: input, shape index: {}]
  %s6 = inlined_call_operand.hbm [shape: f32[3,64,64], index: 6, kind: input, shape index: {}]
  %s7 = inlined_call_operand.vmem [shape: f32[1,64], index: 7, kind: input, shape index: {}]
  %s8 = inlined_call_operand.hbm [shape: f32[16,64], index: 8, kind: output, shape index: {}]
  %s9 = sld [smem:[#allocation0]]
  $region85: #{tpu_custom_call.1} parent=0
    _
  %s11 = ssub.s32 1, %s9
  %s12 = scalar_select 0, %s11, %s9
  $region1: #{tpu_custom_call.1} parent=0
    #allocation4 [shape = 'u8[32768]{0}', space=vmem, size = 0x8000, scoped, tag = 'input window, operand 0']
    #allocation5 [shape = 's32[2]{0}', space=sflag, size = 0x8, scoped, tag = 'scoped memory for tpu_custom_call.1']
    #allocation6 [shape = 's32[2]{0}', space=sflag, size = 0x8, scoped, tag = 'scoped memory for tpu_custom_call.1']
    #allocation7 [shape = 'u8[4096]{0}', space=vmem, size = 0x1000, scoped, tag = 'input window, operand 1, single buffered']
    #allocation8 [shape = 's32[1]{0}', space=sflag, size = 0x4, scoped, tag = 'scoped memory for tpu_custom_call.1']
    #allocation9 [shape = 'u8[49152]{0}', space=vmem, size = 0xc000, scoped, tag = 'input window, operand 2, single buffered']
    #allocation10 [shape = 'u8[98304]{0}', space=vmem, size = 0x18000, scoped, tag = 'input window, operand 4, single buffered']
    #allocation11 [shape = 's32[1]{0}', space=sflag, size = 0x4, scoped, tag = 'scoped memory for tpu_custom_call.1']
    #allocation12 [shape = 'u8[98304]{0}', space=vmem, size = 0x18000, scoped, tag = 'input window, operand 6, single buffered']
    #allocation13 [shape = 'u8[8192]{0}', space=vmem, size = 0x2000, scoped, tag = 'output window, operand 0']
    %13 = vsyncpa [#allocation5], 0
    %s14 = scalar_lea.sflag [#allocation5], 1
    %15 = vsyncpa %s14, 0
    %16 = vsyncpa [#allocation8], 0
    %17 = vsyncpa [#allocation11], 0
    %18 = vsyncpa [#allocation6], 0
    %s19 = scalar_lea.sflag [#allocation6], 1
    %20 = vsyncpa %s19, 0
    loop: start=0, step=1, limit=4
    $region2: #{tpu_custom_call.1} parent=1 // loop_pre_header
      _
    $region3: #{tpu_custom_call.1} parent=1 // loop_header
      %s22 = sphi 0, %s26
      %p23 = scmp.ge.s32.totalorder %s22, 4
      %s32 = sphi 0, %s34
      %s35 = sphi 0, %s32
      %s36 = sphi 0, %s35
      %s52 = sphi 0, %s36
      %s56 = sphi 0, %s56
      %s58 = sphi 0, %s56
      %s59 = sphi 0, %s58
      %s73 = sphi 0, %s59
      %s77 = sphi 0, %s77
      %s79 = sphi 0, %s77
      %s80 = sphi 0, %s79
      %s94 = sphi 0, %s80
      %s98 = sphi 0, %s98
      %s100 = sphi 0, %s98
      %s101 = sphi 0, %s100
      %s115 = sphi 0, %s101
      %s119 = sphi 0, %s119
      %s121 = sphi 0, %s119
      %s122 = sphi 0, %s121
      %s136 = sphi 0, %s122
      %s140 = sphi 0, %s140
      %s142 = sphi 0, %s140
      %s143 = sphi 0, %s142
      %s157 = sphi 0, %s143
      %s161 = sphi 0, %s161
      %s163 = sphi 0, %s161
      %s164 = sphi 0, %s163
      %s178 = sphi 0, %s164
      %s182 = sphi 0, %s182
      %s184 = sphi 0, %s182
      %s185 = sphi 0, %s184
      %s199 = sphi 0, %s185
      %s205 = sphi 0, %s207
      %s208 = sphi 0, %s205
      %s209 = sphi 0, %s208
      %s225 = sphi 0, %s209
    $region4: #{tpu_custom_call.1} parent=1 // loop_header_branch
      %25 = sbr.rel (%p23) target = $region8
    $region5: #{tpu_custom_call.1} parent=1 // loop_body
      %s27 = ssub.s32 %s22, 1
      %s28 = ssub.s32 %s22, 2
      %s29 = sadd.s32 %s22, 1
      %s30 = ssub.s32 %s22, %s29
      %p31 = scmp.eq.s32.totalorder %s30, 0
      %s33 = sadd.s32 %s32, 1
      %s34 = scalar_select %p31, %s32, %s33
      %p37 = pneg %p31
      %p38 = scmp.eq.s32.totalorder %s22, 1
      %p39 = por %p37, %p38
      %p40 = scmp.ne.s32.totalorder %s32, %s35
      %p41 = scmp.eq.s32.totalorder %s22, 0
      %p42 = por %p40, %p41
      %p43 = scmp.ne.s32.totalorder %s32, %s35
      %p44 = scmp.eq.s32.totalorder %s27, 1
      %p45 = por %p43, %p44
      %p46 = scmp.ne.s32.totalorder %s35, %s36
      %p47 = scmp.eq.s32.totalorder %s27, 0
      %p48 = por %p46, %p47
      %p49 = scmp.ne.s32.totalorder %s35, %s36
      %p50 = scmp.eq.s32.totalorder %s28, 1
      %p51 = por %p49, %p50
      %p53 = scmp.ne.s32.totalorder %s36, %s52
      %p54 = scmp.eq.s32.totalorder %s28, 0
      %p55 = por %p53, %p54
      %s57 = sadd.s32 %s56, 1
      %p60 = scmp.eq.s32.totalorder %s22, 1
      %p61 = scmp.ne.s32.totalorder %s56, %s58
      %p62 = scmp.eq.s32.totalorder %s22, 0
      %p63 = por %p61, %p62
      %p64 = scmp.ne.s32.totalorder %s56, %s58
      %p65 = scmp.eq.s32.totalorder %s27, 1
      %p66 = por %p64, %p65
      %p67 = scmp.ne.s32.totalorder %s58, %s59
      %p68 = scmp.eq.s32.totalorder %s27, 0
      %p69 = por %p67, %p68
      %p70 = scmp.ne.s32.totalorder %s58, %s59
      %p71 = scmp.eq.s32.totalorder %s28, 1
      %p72 = por %p70, %p71
      %p74 = scmp.ne.s32.totalorder %s59, %s73
      %p75 = scmp.eq.s32.totalorder %s28, 0
      %p76 = por %p74, %p75
      %s78 = sadd.s32 %s77, 1
      %p81 = scmp.eq.s32.totalorder %s22, 1
      %p82 = scmp.ne.s32.totalorder %s77, %s79
      %p83 = scmp.eq.s32.totalorder %s22, 0
      %p84 = por %p82, %p83
      %p85 = scmp.ne.s32.totalorder %s77, %s79
      %p86 = scmp.eq.s32.totalorder %s27, 1
      %p87 = por %p85, %p86
      %p88 = scmp.ne.s32.totalorder %s79, %s80
      %p89 = scmp.eq.s32.totalorder %s27, 0
      %p90 = por %p88, %p89
      %p91 = scmp.ne.s32.totalorder %s79, %s80
      %p92 = scmp.eq.s32.totalorder %s28, 1
      %p93 = por %p91, %p92
      %p95 = scmp.ne.s32.totalorder %s80, %s94
      %p96 = scmp.eq.s32.totalorder %s28, 0
      %p97 = por %p95, %p96
      %s99 = sadd.s32 %s98, 1
      %p102 = scmp.eq.s32.totalorder %s22, 1
      %p103 = scmp.ne.s32.totalorder %s98, %s100
      %p104 = scmp.eq.s32.totalorder %s22, 0
      %p105 = por %p103, %p104
      %p106 = scmp.ne.s32.totalorder %s98, %s100
      %p107 = scmp.eq.s32.totalorder %s27, 1
      %p108 = por %p106, %p107
      %p109 = scmp.ne.s32.totalorder %s100, %s101
      %p110 = scmp.eq.s32.totalorder %s27, 0
      %p111 = por %p109, %p110
      %p112 = scmp.ne.s32.totalorder %s100, %s101
      %p113 = scmp.eq.s32.totalorder %s28, 1
      %p114 = por %p112, %p113
      %p116 = scmp.ne.s32.totalorder %s101, %s115
      %p117 = scmp.eq.s32.totalorder %s28, 0
      %p118 = por %p116, %p117
      %s120 = sadd.s32 %s119, 1
      %p123 = scmp.eq.s32.totalorder %s22, 1
      %p124 = scmp.ne.s32.totalorder %s119, %s121
      %p125 = scmp.eq.s32.totalorder %s22, 0
      %p126 = por %p124, %p125
      %p127 = scmp.ne.s32.totalorder %s119, %s121
      %p128 = scmp.eq.s32.totalorder %s27, 1
      %p129 = por %p127, %p128
      %p130 = scmp.ne.s32.totalorder %s121, %s122
      %p131 = scmp.eq.s32.totalorder %s27, 0
      %p132 = por %p130, %p131
      %p133 = scmp.ne.s32.totalorder %s121, %s122
      %p134 = scmp.eq.s32.totalorder %s28, 1
      %p135 = por %p133, %p134
      %p137 = scmp.ne.s32.totalorder %s122, %s136
      %p138 = scmp.eq.s32.totalorder %s28, 0
      %p139 = por %p137, %p138
      %s141 = sadd.s32 %s140, 1
      %p144 = scmp.eq.s32.totalorder %s22, 1
      %p145 = scmp.ne.s32.totalorder %s140, %s142
      %p146 = scmp.eq.s32.totalorder %s22, 0
      %p147 = por %p145, %p146
      %p148 = scmp.ne.s32.totalorder %s140, %s142
      %p149 = scmp.eq.s32.totalorder %s27, 1
      %p150 = por %p148, %p149
      %p151 = scmp.ne.s32.totalorder %s142, %s143
      %p152 = scmp.eq.s32.totalorder %s27, 0
      %p153 = por %p151, %p152
      %p154 = scmp.ne.s32.totalorder %s142, %s143
      %p155 = scmp.eq.s32.totalorder %s28, 1
      %p156 = por %p154, %p155
      %p158 = scmp.ne.s32.totalorder %s143, %s157
      %p159 = scmp.eq.s32.totalorder %s28, 0
      %p160 = por %p158, %p159
      %s162 = sadd.s32 %s161, 1
      %p165 = scmp.eq.s32.totalorder %s22, 1
      %p166 = scmp.ne.s32.totalorder %s161, %s163
      %p167 = scmp.eq.s32.totalorder %s22, 0
      %p168 = por %p166, %p167
      %p169 = scmp.ne.s32.totalorder %s161, %s163
      %p170 = scmp.eq.s32.totalorder %s27, 1
      %p171 = por %p169, %p170
      %p172 = scmp.ne.s32.totalorder %s163, %s164
      %p173 = scmp.eq.s32.totalorder %s27, 0
      %p174 = por %p172, %p173
      %p175 = scmp.ne.s32.totalorder %s163, %s164
      %p176 = scmp.eq.s32.totalorder %s28, 1
      %p177 = por %p175, %p176
      %p179 = scmp.ne.s32.totalorder %s164, %s178
      %p180 = scmp.eq.s32.totalorder %s28, 0
      %p181 = por %p179, %p180
      %s183 = sadd.s32 %s182, 1
      %p186 = scmp.eq.s32.totalorder %s22, 1
      %p187 = scmp.ne.s32.totalorder %s182, %s184
      %p188 = scmp.eq.s32.totalorder %s22, 0
      %p189 = por %p187, %p188
      %p190 = scmp.ne.s32.totalorder %s182, %s184
      %p191 = scmp.eq.s32.totalorder %s27, 1
      %p192 = por %p190, %p191
      %p193 = scmp.ne.s32.totalorder %s184, %s185
      %p194 = scmp.eq.s32.totalorder %s27, 0
      %p195 = por %p193, %p194
      %p196 = scmp.ne.s32.totalorder %s184, %s185
      %p197 = scmp.eq.s32.totalorder %s28, 1
      %p198 = por %p196, %p197
      %p200 = scmp.ne.s32.totalorder %s185, %s199
      %p201 = scmp.eq.s32.totalorder %s28, 0
      %p202 = por %p200, %p201
      %s203 = ssub.s32 %s22, %s29
      %p204 = scmp.eq.s32.totalorder %s203, 0
      %s206 = sadd.s32 %s205, 1
      %s207 = scalar_select %p204, %s205, %s206
      %p210 = pneg %p204
      %p211 = scmp.eq.s32.totalorder %s22, 1
      %p212 = por %p210, %p211
      %p213 = scmp.ne.s32.totalorder %s205, %s208
      %p214 = scmp.eq.s32.totalorder %s22, 0
      %p215 = por %p213, %p214
      %p216 = scmp.ne.s32.totalorder %s205, %s208
      %p217 = scmp.eq.s32.totalorder %s27, 1
      %p218 = por %p216, %p217
      %p219 = scmp.ne.s32.totalorder %s208, %s209
      %p220 = scmp.eq.s32.totalorder %s27, 0
      %p221 = por %p219, %p220
      %p222 = scmp.ne.s32.totalorder %s208, %s209
      %p223 = scmp.eq.s32.totalorder %s28, 1
      %p224 = por %p222, %p223
      %p226 = scmp.ne.s32.totalorder %s209, %s225
      %p227 = scmp.eq.s32.totalorder %s28, 0
      %p228 = por %p226, %p227
      %p229 = scmp.le.s32.totalorder 1, %s22
      %p230 = scmp.lt.s32.totalorder %s22, 3
      %p231 = pnand %p229, %p230
      %p232 = pneg %p231
      // Predicated region
      $region9: #{tpu_custom_call.1} parent=5 // pred_check
        _
      $region10: #{tpu_custom_call.1} parent=5 // pred_check_branch
        %234 = sbr.rel (%p231) target = $region12
      $region11: #{tpu_custom_call.1} parent=5 // pred_region
        %s235 = ssub.s32 %s22, 1
        // Predicated region
        $region13: #{tpu_custom_call.1} parent=11 // pred_check
          %p236 = pneg %p69
        $region14: #{tpu_custom_call.1} parent=11 // pred_check_branch
          %238 = sbr.rel (%p236) target = $region16
        $region15: #{tpu_custom_call.1} parent=11 // pred_region
          %240 = vsyncadd [#allocation8], 0
          %s242 = sshll.u32 %s1, 4
          %s243 = int_to_ptr.hbm [resolvable:$true] %s242
          %s244 = sshll.u32 [#allocation7], 4
          %s245 = int_to_ptr.vmem [resolvable:$true] %s244
          %247 = dma.hbm_to_vmem [thread:$0]  %s243, 128, %s245, [#allocation8]
        $region16: #{tpu_custom_call.1} parent=11 // pred_fallthru
          _
        // Predicated region
        $region17: #{tpu_custom_call.1} parent=11 // pred_check
          %p248 = pneg %p90
        $region18: #{tpu_custom_call.1} parent=11 // pred_check_branch
          %250 = sbr.rel (%p248) target = $region20
        $region19: #{tpu_custom_call.1} parent=11 // pred_region
          %252 = vsyncadd [#allocation8], 0
          %s253 = sshll.u32 %s2, 4
          %s254 = int_to_ptr.hbm [resolvable:$true] %s253
          %s255 = sshll.u32 [#allocation9], 4
          %s256 = int_to_ptr.vmem [resolvable:$true] %s255
          %261 = dma.hbm_to_vmem [thread:$0]  %s254, 1536, %s256, [#allocation8], 128, 128, 8
        $region20: #{tpu_custom_call.1} parent=11 // pred_fallthru
          _
        // Predicated region
        $region21: #{tpu_custom_call.1} parent=11 // pred_check
          %p262 = pneg %p111
        $region22: #{tpu_custom_call.1} parent=11 // pred_check_branch
          %264 = sbr.rel (%p262) target = $region24
        $region23: #{tpu_custom_call.1} parent=11 // pred_region
          _
        $region24: #{tpu_custom_call.1} parent=11 // pred_fallthru
          _
        // Predicated region
        $region25: #{tpu_custom_call.1} parent=11 // pred_check
          %p265 = pneg %p132
        $region26: #{tpu_custom_call.1} parent=11 // pred_check_branch
          %267 = sbr.rel (%p265) target = $region28
        $region27: #{tpu_custom_call.1} parent=11 // pred_region
          %269 = vsyncadd [#allocation11], 0
          %s270 = sshll.u32 %s4, 4
          %s271 = int_to_ptr.hbm [resolvable:$true] %s270
          %s272 = sshll.u32 [#allocation10], 4
          %s273 = int_to_ptr.vmem [resolvable:$true] %s272
          %278 = dma.hbm_to_vmem [thread:$0]  %s271, 3072, %s273, [#allocation11], 128, 128, 8
        $region28: #{tpu_custom_call.1} parent=11 // pred_fallthru
          _
        // Predicated region
        $region29: #{tpu_custom_call.1} parent=11 // pred_check
          %p279 = pneg %p153
        $region30: #{tpu_custom_call.1} parent=11 // pred_check_branch
          %281 = sbr.rel (%p279) target = $region32
        $region31: #{tpu_custom_call.1} parent=11 // pred_region
          _
        $region32: #{tpu_custom_call.1} parent=11 // pred_fallthru
          _
        // Predicated region
        $region33: #{tpu_custom_call.1} parent=11 // pred_check
          %p282 = pneg %p174
        $region34: #{tpu_custom_call.1} parent=11 // pred_check_branch
          %284 = sbr.rel (%p282) target = $region36
        $region35: #{tpu_custom_call.1} parent=11 // pred_region
          %286 = vsyncadd [#allocation11], 0
          %s287 = sshll.u32 %s6, 4
          %s288 = int_to_ptr.hbm [resolvable:$true] %s287
          %s289 = sshll.u32 [#allocation12], 4
          %s290 = int_to_ptr.vmem [resolvable:$true] %s289
          %295 = dma.hbm_to_vmem [thread:$0]  %s288, 3072, %s290, [#allocation11], 128, 128, 8
        $region36: #{tpu_custom_call.1} parent=11 // pred_fallthru
          _
        // Predicated region
        $region37: #{tpu_custom_call.1} parent=11 // pred_check
          %p296 = pneg %p195
        $region38: #{tpu_custom_call.1} parent=11 // pred_check_branch
          %298 = sbr.rel (%p296) target = $region40
        $region39: #{tpu_custom_call.1} parent=11 // pred_region
          _
        $region40: #{tpu_custom_call.1} parent=11 // pred_fallthru
          _
      $region12: #{tpu_custom_call.1} parent=5 // pred_fallthru
        _
      %p299 = scmp.lt.s32.totalorder %s22, 2
      // Predicated region
      $region41: #{tpu_custom_call.1} parent=5 // pred_check
        %p300 = pneg %p299
      $region42: #{tpu_custom_call.1} parent=5 // pred_check_branch
        %302 = sbr.rel (%p300) target = $region44
      $region43: #{tpu_custom_call.1} parent=5 // pred_region
        // Predicated region
        $region45: #{tpu_custom_call.1} parent=43 // pred_check
          %p303 = pneg %p42
        $region46: #{tpu_custom_call.1} parent=43 // pred_check_branch
          %305 = sbr.rel (%p303) target = $region48
        $region47: #{tpu_custom_call.1} parent=43 // pred_region
          %s306 = sand.u32 %s32, 1
          %s307 = scalar_lea.sflag [#allocation5], %s306
          %s308 = sand.u32 %s32, 1
          %s309 = smul.addr %s308, 32
          %s310 = scalar_lea.vmem [#allocation4], %s309
          %312 = vsyncadd %s307, 0
          %s313 = smul.addr %s22, 8
          %s314 = scalar_lea.hbm %s0, %s313
          %s315 = sshll.u32 %s314, 4
          %s316 = int_to_ptr.hbm [resolvable:$true] %s315
          %s317 = sshll.u32 %s310, 4
          %s318 = int_to_ptr.vmem [resolvable:$true] %s317
          %323 = dma.hbm_to_vmem [thread:$0]  %s316, 512, %s318, %s307, 256, 128, 8
        $region48: #{tpu_custom_call.1} parent=43 // pred_fallthru
          _
      $region44: #{tpu_custom_call.1} parent=5 // pred_fallthru
        _
      %p324 = scmp.le.s32.totalorder 1, %s22
      %p325 = scmp.lt.s32.totalorder %s22, 3
      %p326 = pnand %p324, %p325
      %p327 = pneg %p326
      // Predicated region
      $region49: #{tpu_custom_call.1} parent=5 // pred_check
        _
      $region50: #{tpu_custom_call.1} parent=5 // pred_check_branch
        %329 = sbr.rel (%p326) target = $region52
      $region51: #{tpu_custom_call.1} parent=5 // pred_region
        %s330 = ssub.s32 %s22, 1
        %s331 = sand.u32 %s35, 1
        %s332 = scalar_lea.sflag [#allocation5], %s331
        %s333 = sand.u32 %s35, 1
        %s334 = smul.addr %s333, 32
        %s335 = scalar_lea.vmem [#allocation4], %s334
        // Predicated region
        $region53: #{tpu_custom_call.1} parent=51 // pred_check
          %p336 = pneg %p48
        $region54: #{tpu_custom_call.1} parent=51 // pred_check_branch
          %338 = sbr.rel (%p336) target = $region56
        $region55: #{tpu_custom_call.1} parent=51 // pred_region
          %340 = dma.done %s332, 512
        $region56: #{tpu_custom_call.1} parent=51 // pred_fallthru
          _
        // Predicated region
        $region57: #{tpu_custom_call.1} parent=51 // pred_check
          %p341 = pneg %p69
        $region58: #{tpu_custom_call.1} parent=51 // pred_check_branch
          %343 = sbr.rel (%p341) target = $region60
        $region59: #{tpu_custom_call.1} parent=51 // pred_region
          %345 = dma.done [#allocation8], 128
        $region60: #{tpu_custom_call.1} parent=51 // pred_fallthru
          _
        // Predicated region
        $region61: #{tpu_custom_call.1} parent=51 // pred_check
          %p346 = pneg %p90
        $region62: #{tpu_custom_call.1} parent=51 // pred_check_branch
          %348 = sbr.rel (%p346) target = $region64
        $region63: #{tpu_custom_call.1} parent=51 // pred_region
          %350 = dma.done [#allocation8], 1536
        $region64: #{tpu_custom_call.1} parent=51 // pred_fallthru
          _
        // Predicated region
        $region65: #{tpu_custom_call.1} parent=51 // pred_check
          %p351 = pneg %p132
        $region66: #{tpu_custom_call.1} parent=51 // pred_check_branch
          %353 = sbr.rel (%p351) target = $region68
        $region67: #{tpu_custom_call.1} parent=51 // pred_region
          %355 = dma.done [#allocation11], 3072
        $region68: #{tpu_custom_call.1} parent=51 // pred_fallthru
          _
        // Predicated region
        $region69: #{tpu_custom_call.1} parent=51 // pred_check
          %p356 = pneg %p174
        $region70: #{tpu_custom_call.1} parent=51 // pred_check_branch
          %358 = sbr.rel (%p356) target = $region72
        $region71: #{tpu_custom_call.1} parent=51 // pred_region
          %360 = dma.done [#allocation11], 3072
        $region72: #{tpu_custom_call.1} parent=51 // pred_fallthru
          _
        %s361 = sand.u32 %s35, 1
        %s362 = scalar_lea.sflag [#allocation5], %s361
        %s363 = sand.u32 %s35, 1
        %s364 = smul.addr %s363, 32
        %s365 = scalar_lea.vmem [#allocation4], %s364
        %p366 = pneg %p48
        %p367 = pneg %p45
        %p368 = pneg %p69
        %p369 = pneg %p66
        %p370 = pneg %p90
        %p371 = pneg %p87
        %p372 = pneg %p111
        %p373 = pneg %p108
        %p374 = pneg %p132
        %p375 = pneg %p129
        %p376 = pneg %p153
        %p377 = pneg %p150
        %p378 = pneg %p174
        %p379 = pneg %p171
        %p380 = pneg %p195
        %p381 = pneg %p192
        %p382 = pneg %p221
        %p383 = pneg %p218
        %s384 = sand.u32 %s208, 1
        %s385 = scalar_lea.sflag [#allocation6], %s384
        %s386 = sand.u32 %s208, 1
        %s387 = smul.addr %s386, 8
        %s388 = scalar_lea.vmem [#allocation13], %s387
        %v389 = vld [vmem:[%s335] sm:$0xff]
        %s390 = scalar_lea.vmem %s335, 8 [#allocation4]
        %v391 = vld [vmem:[%s390] sm:$0xff]
        %v392 = vadd.f32 %v389, %v391
        %s393 = scalar_lea.vmem %s335, 16 [#allocation4]
        %v394 = vld [vmem:[%s393] sm:$0xff]
        %v395 = vadd.f32 %v392, %v394
        %s396 = scalar_lea.vmem %s335, 24 [#allocation4]
        %v397 = vld [vmem:[%s396] sm:$0xff]
        %v398 = vadd.f32 %v395, %v397
        %v399 = vld [vmem:[#allocation7] sm:$0xff]
        %v400 = vmul.f32 %v398, %v399
        %vm401 = vcmask 253952
        %402 = vst.msk [vmem:[#allocation2] sm:$0x1] %vm401, 0.0
        %403 = vst.msk [vmem:[#allocation2 + $0x9] sm:$0x1] %vm401, 0.0
        %vm404 = vcmask 516096
        %405 = vst.msk [vmem:[#allocation3] sm:$0x1] %vm404, 0.0
        %406 = vst.msk [vmem:[#allocation3 + $0x9] sm:$0x1] %vm404, 0.0
        %vm407 = vcmask 261120
        %408 = vst.msk [vmem:[#allocation2 + $0x1] sm:$0xff] %vm407, %v400
        %v409 = vld [vmem:[#allocation2] sm:$0xff]
        %v410 = vld [vmem:[#allocation9] sm:$0xff]
        %v411 = vld [vmem:[#allocation9 + $0x8] sm:$0xff]
        %v412 = vld [vmem:[#allocation9 + $0x10] sm:$0xff]
        %v413 = vld [vmem:[#allocation9 + $0x18] sm:$0xff]
        %v414 = vld [vmem:[#allocation2 + $0x1] sm:$0xff]
        %s415 = scalar_lea.vmem [#allocation9], 32
        %v416 = vld [vmem:[%s415] sm:$0xff]
        %v417 = vld [vmem:[%s415 + $0x8] sm:$0xff]
        %v418 = vld [vmem:[%s415 + $0x10] sm:$0xff]
        %v419 = vld [vmem:[%s415 + $0x18] sm:$0xff]
        %v421 = vsel %vm407, %v414, 0
        %423 = vmatpush.msra.mxu0 0.0
        %424 = vmatpush.msra.mxu0 0.0
        %425 = vmatpush.msra.mxu0 0.0
        %426 = vmatpush.msra.mxu0 0.0
        %427 = vmatpush.msra.mxu0 0.0
        %428 = vmatpush.msra.mxu0 0.0
        %429 = vmatpush.msra.mxu0 0.0
        %430 = vmatpush.msra.mxu0 0.0
        %431 = vmatpush.msra.mxu0 0.0
        %432 = vmatpush.msra.mxu0 0.0
        %433 = vmatpush.msra.mxu0 0.0
        %434 = vmatpush.msra.mxu0 0.0
        %435 = vmatpush.msra.mxu0 %v419
        %436 = vmatpush.msra.mxu0 %v418
        %437 = vmatpush.msra.mxu0 %v417
        %438 = vmatpush.msra.mxu0 %v416
        %439 = vmatmul.f32.gmra.mxu0 %v421
        %v440 = vpop.f32.mrf.mxu0
        %v441 = vadd.f32 0.0, %v440
        %442 = vdwg.mxu0
        %v444 = vsel %vm407, %v409, 0
        %446 = vmatpush.msra.mxu0 0.0
        %447 = vmatpush.msra.mxu0 0.0
        %448 = vmatpush.msra.mxu0 0.0
        %449 = vmatpush.msra.mxu0 0.0
        %450 = vmatpush.msra.mxu0 0.0
        %451 = vmatpush.msra.mxu0 0.0
        %452 = vmatpush.msra.mxu0 0.0
        %453 = vmatpush.msra.mxu0 0.0
        %454 = vmatpush.msra.mxu0 0.0
        %455 = vmatpush.msra.mxu0 0.0
        %456 = vmatpush.msra.mxu0 0.0
        %457 = vmatpush.msra.mxu0 0.0
        %458 = vmatpush.msra.mxu0 %v413
        %459 = vmatpush.msra.mxu0 %v412
        %460 = vmatpush.msra.mxu0 %v411
        %461 = vmatpush.msra.mxu0 %v410
        %462 = vmatmul.f32.gmra.mxu0 %v444
        %v463 = vpop.f32.mrf.mxu0
        %v464 = vadd.f32 %v441, %v463
        %465 = vdwg.mxu0
        %v466 = vld [vmem:[#allocation2 + $0x2] sm:$0xff]
        %s467 = scalar_lea.vmem [#allocation9], 64
        %v468 = vld [vmem:[%s467] sm:$0xff]
        %v469 = vld [vmem:[%s467 + $0x8] sm:$0xff]
        %v470 = vld [vmem:[%s467 + $0x10] sm:$0xff]
        %v471 = vld [vmem:[%s467 + $0x18] sm:$0xff]
        %v473 = vsel %vm407, %v466, 0
        %475 = vmatpush.msra.mxu0 0.0
        %476 = vmatpush.msra.mxu0 0.0
        %477 = vmatpush.msra.mxu0 0.0
        %478 = vmatpush.msra.mxu0 0.0
        %479 = vmatpush.msra.mxu0 0.0
        %480 = vmatpush.msra.mxu0 0.0
        %481 = vmatpush.msra.mxu0 0.0
        %482 = vmatpush.msra.mxu0 0.0
        %483 = vmatpush.msra.mxu0 0.0
        %484 = vmatpush.msra.mxu0 0.0
        %485 = vmatpush.msra.mxu0 0.0
        %486 = vmatpush.msra.mxu0 0.0
        %487 = vmatpush.msra.mxu0 %v471
        %488 = vmatpush.msra.mxu0 %v470
        %489 = vmatpush.msra.mxu0 %v469
        %490 = vmatpush.msra.mxu0 %v468
        %491 = vmatmul.f32.gmra.mxu0 %v473
        %v492 = vpop.f32.mrf.mxu0
        %v493 = vadd.f32 0.0, %v492
        %494 = vdwg.mxu0
        %v495 = vadd.f32 %v464, %v493
        %v496 = vld [vmem:[%s3] sm:$0x1]
        %v498 = vperm.slane %v496, 0
        %v500 = vadd.f32 %v495, %v498
        %v501 = vmax.f32 %v500, 0.0
        %vm502 = vcmask 523264
        %503 = vst.msk [vmem:[#allocation3 + $0x1] sm:$0xff] %vm502, %v501
        %v504 = vld [vmem:[#allocation3] sm:$0xff]
        %v505 = vld [vmem:[#allocation10] sm:$0xff]
        %v506 = vld [vmem:[#allocation10 + $0x8] sm:$0xff]
        %v507 = vld [vmem:[#allocation10 + $0x10] sm:$0xff]
        %v508 = vld [vmem:[#allocation10 + $0x18] sm:$0xff]
        %v509 = vld [vmem:[#allocation10 + $0x20] sm:$0xff]
        %v510 = vld [vmem:[#allocation10 + $0x28] sm:$0xff]
        %v511 = vld [vmem:[#allocation10 + $0x30] sm:$0xff]
        %v512 = vld [vmem:[#allocation10 + $0x38] sm:$0xff]
        %v513 = vld [vmem:[#allocation3 + $0x1] sm:$0xff]
        %s514 = scalar_lea.vmem [#allocation10], 64
        %v515 = vld [vmem:[%s514] sm:$0xff]
        %v516 = vld [vmem:[%s514 + $0x8] sm:$0xff]
        %v517 = vld [vmem:[%s514 + $0x10] sm:$0xff]
        %v518 = vld [vmem:[%s514 + $0x18] sm:$0xff]
        %v519 = vld [vmem:[%s514 + $0x20] sm:$0xff]
        %v520 = vld [vmem:[%s514 + $0x28] sm:$0xff]
        %v521 = vld [vmem:[%s514 + $0x30] sm:$0xff]
        %v522 = vld [vmem:[%s514 + $0x38] sm:$0xff]
        %v524 = vsel %vm502, %v513, 0
        %526 = vmatpush.msra.mxu0 0.0
        %527 = vmatpush.msra.mxu0 0.0
        %528 = vmatpush.msra.mxu0 0.0
        %529 = vmatpush.msra.mxu0 0.0
        %530 = vmatpush.msra.mxu0 0.0
        %531 = vmatpush.msra.mxu0 0.0
        %532 = vmatpush.msra.mxu0 0.0
        %533 = vmatpush.msra.mxu0 0.0
        %534 = vmatpush.msra.mxu0 %v522
        %535 = vmatpush.msra.mxu0 %v521
        %536 = vmatpush.msra.mxu0 %v520
        %537 = vmatpush.msra.mxu0 %v519
        %538 = vmatpush.msra.mxu0 %v518
        %539 = vmatpush.msra.mxu0 %v517
        %540 = vmatpush.msra.mxu0 %v516
        %541 = vmatpush.msra.mxu0 %v515
        %542 = vmatmul.f32.gmra.mxu0 %v524
        %v543 = vpop.f32.mrf.mxu0
        %v544 = vadd.f32 0.0, %v543
        %545 = vdwg.mxu0
        %v547 = vsel %vm502, %v504, 0
        %549 = vmatpush.msra.mxu0 0.0
        %550 = vmatpush.msra.mxu0 0.0
        %551 = vmatpush.msra.mxu0 0.0
        %552 = vmatpush.msra.mxu0 0.0
        %553 = vmatpush.msra.mxu0 0.0
        %554 = vmatpush.msra.mxu0 0.0
        %555 = vmatpush.msra.mxu0 0.0
        %556 = vmatpush.msra.mxu0 0.0
        %557 = vmatpush.msra.mxu0 %v512
        %558 = vmatpush.msra.mxu0 %v511
        %559 = vmatpush.msra.mxu0 %v510
        %560 = vmatpush.msra.mxu0 %v509
        %561 = vmatpush.msra.mxu0 %v508
        %562 = vmatpush.msra.mxu0 %v507
        %563 = vmatpush.msra.mxu0 %v506
        %564 = vmatpush.msra.mxu0 %v505
        %565 = vmatmul.f32.gmra.mxu0 %v547
        %v566 = vpop.f32.mrf.mxu0
        %v567 = vadd.f32 %v544, %v566
        %568 = vdwg.mxu0
        %v569 = vld [vmem:[#allocation3 + $0x2] sm:$0xff]
        %s570 = scalar_lea.vmem [#allocation10], 128
        %v571 = vld [vmem:[%s570] sm:$0xff]
        %v572 = vld [vmem:[%s570 + $0x8] sm:$0xff]
        %v573 = vld [vmem:[%s570 + $0x10] sm:$0xff]
        %v574 = vld [vmem:[%s570 + $0x18] sm:$0xff]
        %v575 = vld [vmem:[%s570 + $0x20] sm:$0xff]
        %v576 = vld [vmem:[%s570 + $0x28] sm:$0xff]
        %v577 = vld [vmem:[%s570 + $0x30] sm:$0xff]
        %v578 = vld [vmem:[%s570 + $0x38] sm:$0xff]
        %v580 = vsel %vm502, %v569, 0
        %582 = vmatpush.msra.mxu0 0.0
        %583 = vmatpush.msra.mxu0 0.0
        %584 = vmatpush.msra.mxu0 0.0
        %585 = vmatpush.msra.mxu0 0.0
        %586 = vmatpush.msra.mxu0 0.0
        %587 = vmatpush.msra.mxu0 0.0
        %588 = vmatpush.msra.mxu0 0.0
        %589 = vmatpush.msra.mxu0 0.0
        %590 = vmatpush.msra.mxu0 %v578
        %591 = vmatpush.msra.mxu0 %v577
        %592 = vmatpush.msra.mxu0 %v576
        %593 = vmatpush.msra.mxu0 %v575
        %594 = vmatpush.msra.mxu0 %v574
        %595 = vmatpush.msra.mxu0 %v573
        %596 = vmatpush.msra.mxu0 %v572
        %597 = vmatpush.msra.mxu0 %v571
        %598 = vmatmul.f32.gmra.mxu0 %v580
        %v599 = vpop.f32.mrf.mxu0
        %v600 = vadd.f32 0.0, %v599
        %601 = vdwg.mxu0
        %v602 = vadd.f32 %v567, %v600
        %v603 = vld [vmem:[%s5] sm:$0x1]
        %v605 = vperm.slane %v603, 0
        %v607 = vadd.f32 %v602, %v605
        %v608 = vmax.f32 %v607, 0.0
        %609 = vst.msk [vmem:[#allocation3 + $0x1] sm:$0xff] %vm502, %v608
        %v610 = vld [vmem:[#allocation3] sm:$0xff]
        %v611 = vld [vmem:[#allocation12] sm:$0xff]
        %v612 = vld [vmem:[#allocation12 + $0x8] sm:$0xff]
        %v613 = vld [vmem:[#allocation12 + $0x10] sm:$0xff]
        %v614 = vld [vmem:[#allocation12 + $0x18] sm:$0xff]
        %v615 = vld [vmem:[#allocation12 + $0x20] sm:$0xff]
        %v616 = vld [vmem:[#allocation12 + $0x28] sm:$0xff]
        %v617 = vld [vmem:[#allocation12 + $0x30] sm:$0xff]
        %v618 = vld [vmem:[#allocation12 + $0x38] sm:$0xff]
        %v619 = vld [vmem:[#allocation3 + $0x1] sm:$0xff]
        %s620 = scalar_lea.vmem [#allocation12], 64
        %v621 = vld [vmem:[%s620] sm:$0xff]
        %v622 = vld [vmem:[%s620 + $0x8] sm:$0xff]
        %v623 = vld [vmem:[%s620 + $0x10] sm:$0xff]
        %v624 = vld [vmem:[%s620 + $0x18] sm:$0xff]
        %v625 = vld [vmem:[%s620 + $0x20] sm:$0xff]
        %v626 = vld [vmem:[%s620 + $0x28] sm:$0xff]
        %v627 = vld [vmem:[%s620 + $0x30] sm:$0xff]
        %v628 = vld [vmem:[%s620 + $0x38] sm:$0xff]
        %v630 = vsel %vm502, %v619, 0
        %632 = vmatpush.msra.mxu0 0.0
        %633 = vmatpush.msra.mxu0 0.0
        %634 = vmatpush.msra.mxu0 0.0
        %635 = vmatpush.msra.mxu0 0.0
        %636 = vmatpush.msra.mxu0 0.0
        %637 = vmatpush.msra.mxu0 0.0
        %638 = vmatpush.msra.mxu0 0.0
        %639 = vmatpush.msra.mxu0 0.0
        %640 = vmatpush.msra.mxu0 %v628
        %641 = vmatpush.msra.mxu0 %v627
        %642 = vmatpush.msra.mxu0 %v626
        %643 = vmatpush.msra.mxu0 %v625
        %644 = vmatpush.msra.mxu0 %v624
        %645 = vmatpush.msra.mxu0 %v623
        %646 = vmatpush.msra.mxu0 %v622
        %647 = vmatpush.msra.mxu0 %v621
        %648 = vmatmul.f32.gmra.mxu0 %v630
        %v649 = vpop.f32.mrf.mxu0
        %v650 = vadd.f32 0.0, %v649
        %651 = vdwg.mxu0
        %v653 = vsel %vm502, %v610, 0
        %655 = vmatpush.msra.mxu0 0.0
        %656 = vmatpush.msra.mxu0 0.0
        %657 = vmatpush.msra.mxu0 0.0
        %658 = vmatpush.msra.mxu0 0.0
        %659 = vmatpush.msra.mxu0 0.0
        %660 = vmatpush.msra.mxu0 0.0
        %661 = vmatpush.msra.mxu0 0.0
        %662 = vmatpush.msra.mxu0 0.0
        %663 = vmatpush.msra.mxu0 %v618
        %664 = vmatpush.msra.mxu0 %v617
        %665 = vmatpush.msra.mxu0 %v616
        %666 = vmatpush.msra.mxu0 %v615
        %667 = vmatpush.msra.mxu0 %v614
        %668 = vmatpush.msra.mxu0 %v613
        %669 = vmatpush.msra.mxu0 %v612
        %670 = vmatpush.msra.mxu0 %v611
        %671 = vmatmul.f32.gmra.mxu0 %v653
        %v672 = vpop.f32.mrf.mxu0
        %v673 = vadd.f32 %v650, %v672
        %674 = vdwg.mxu0
        %v675 = vld [vmem:[#allocation3 + $0x2] sm:$0xff]
        %s676 = scalar_lea.vmem [#allocation12], 128
        %v677 = vld [vmem:[%s676] sm:$0xff]
        %v678 = vld [vmem:[%s676 + $0x8] sm:$0xff]
        %v679 = vld [vmem:[%s676 + $0x10] sm:$0xff]
        %v680 = vld [vmem:[%s676 + $0x18] sm:$0xff]
        %v681 = vld [vmem:[%s676 + $0x20] sm:$0xff]
        %v682 = vld [vmem:[%s676 + $0x28] sm:$0xff]
        %v683 = vld [vmem:[%s676 + $0x30] sm:$0xff]
        %v684 = vld [vmem:[%s676 + $0x38] sm:$0xff]
        %v686 = vsel %vm502, %v675, 0
        %688 = vmatpush.msra.mxu0 0.0
        %689 = vmatpush.msra.mxu0 0.0
        %690 = vmatpush.msra.mxu0 0.0
        %691 = vmatpush.msra.mxu0 0.0
        %692 = vmatpush.msra.mxu0 0.0
        %693 = vmatpush.msra.mxu0 0.0
        %694 = vmatpush.msra.mxu0 0.0
        %695 = vmatpush.msra.mxu0 0.0
        %696 = vmatpush.msra.mxu0 %v684
        %697 = vmatpush.msra.mxu0 %v683
        %698 = vmatpush.msra.mxu0 %v682
        %699 = vmatpush.msra.mxu0 %v681
        %700 = vmatpush.msra.mxu0 %v680
        %701 = vmatpush.msra.mxu0 %v679
        %702 = vmatpush.msra.mxu0 %v678
        %703 = vmatpush.msra.mxu0 %v677
        %704 = vmatmul.f32.gmra.mxu0 %v686
        %v705 = vpop.f32.mrf.mxu0
        %v706 = vadd.f32 0.0, %v705
        %707 = vdwg.mxu0
        %v708 = vadd.f32 %v673, %v706
        %v709 = vld [vmem:[%s7] sm:$0x1]
        %v711 = vperm.slane %v709, 0
        %v713 = vadd.f32 %v708, %v711
        %v714 = vmax.f32 %v713, 0.0
        %715 = vst.msk [vmem:[%s388] sm:$0xff] %vm502, %v714
        %s716 = sand.u32 %s208, 1
        %s717 = scalar_lea.sflag [#allocation6], %s716
        %s718 = sand.u32 %s208, 1
        %s719 = smul.addr %s718, 8
        %s720 = scalar_lea.vmem [#allocation13], %s719
        // Predicated region
        $region73: #{tpu_custom_call.1} parent=51 // pred_check
          %p721 = pneg %p218
        $region74: #{tpu_custom_call.1} parent=51 // pred_check_branch
          %723 = sbr.rel (%p721) target = $region76
        $region75: #{tpu_custom_call.1} parent=51 // pred_region
          %725 = vsyncadd %s717, 0
          %s726 = smul.addr %s27, 8
          %s727 = scalar_lea.hbm %s8, %s726
          %s729 = sshll.u32 %s720, 4
          %s730 = int_to_ptr.vmem [resolvable:$true] %s729
          %s731 = sshll.u32 %s727, 4
          %s732 = int_to_ptr.hbm [resolvable:$true] %s731
          %734 = dma.vmem_to_hbm [thread:$0]  %s730, 128, %s732, %s717
        $region76: #{tpu_custom_call.1} parent=51 // pred_fallthru
          _
      $region52: #{tpu_custom_call.1} parent=5 // pred_fallthru
        _
      %p735 = scmp.le.s32.totalorder 2, %s22
      // Predicated region
      $region77: #{tpu_custom_call.1} parent=5 // pred_check
        %p736 = pneg %p735
      $region78: #{tpu_custom_call.1} parent=5 // pred_check_branch
        %738 = sbr.rel (%p736) target = $region80
      $region79: #{tpu_custom_call.1} parent=5 // pred_region
        %s739 = ssub.s32 %s22, 2
        // Predicated region
        $region81: #{tpu_custom_call.1} parent=79 // pred_check
          %p740 = pneg %p224
        $region82: #{tpu_custom_call.1} parent=79 // pred_check_branch
          %742 = sbr.rel (%p740) target = $region84
        $region83: #{tpu_custom_call.1} parent=79 // pred_region
          %s743 = sand.u32 %s209, 1
          %s744 = scalar_lea.sflag [#allocation6], %s743
          %s745 = sand.u32 %s209, 1
          %s746 = smul.addr %s745, 8
          %s747 = scalar_lea.vmem [#allocation13], %s746
          %749 = dma.done %s744, 128
        $region84: #{tpu_custom_call.1} parent=79 // pred_fallthru
          _
      $region80: #{tpu_custom_call.1} parent=5 // pred_fallthru
        _
    $region6: #{tpu_custom_call.1} parent=1 // loop_footer
      %s26 = sadd.s32 1, %s22
    $region7: #{tpu_custom_call.1} parent=1 // loop_footer_branch
      %21 = sbr.rel target = $region3
    $region8: #{tpu_custom_call.1} parent=1 // loop_exit
      _
    %750 = vsyncpa [#allocation5], 1
    %s751 = scalar_lea.sflag [#allocation5], 1
    %752 = vsyncpa %s751, 1
    %753 = vsyncpa [#allocation8], 1
    %754 = vsyncpa [#allocation11], 1
    %755 = vsyncpa [#allocation6], 1
    %s756 = scalar_lea.sflag [#allocation6], 1
    %757 = vsyncpa %s756, 1

</llo_original>
